<compile_context>
chip_gen: v5e
topology: v5e:2x2
jax: 0.10.0
libtpu: 0.0.40
codegen_flags: <defaults>
</compile_context>

<pallas_src>
import functools

import jax
import jax.numpy as jnp
from jax.experimental import pallas as pl
from jax.experimental.pallas import tpu as pltpu

# ---- module hyper-params (mirrors the PyTorch script) -----------------------
block_size = 8
n_embed = 32
text = "hello pallas tpu kernels! this is a tiny bigram language model."
chars = sorted(list(set(text)))
vocab_size = len(chars)

LANE = 128
NEG_INF_BIAS = -1e30


def _round_up(x, m):
    return ((x + m - 1) // m) * m


def _pick_tile_n(n):
    """Largest row tile (<=512, multiple of 8) that divides N, else full N."""
    for t in (512, 256, 128, 64, 32, 16, 8):
        if n % t == 0:
            return t
    return n


# ---- Pallas kernels ----------------------------------------------------------
def _loss_kernel(n_rows, x_ref, w_ref, b_ref, tgt_ref,
                 logits_ref, loss_ref, acc_ref):
    """One row-tile: logits = x @ W + b, plus cross-entropy partial sum."""
    i = pl.program_id(0)

    @pl.when(i == 0)
    def _init():
        acc_ref[0] = jnp.float32(0.0)

    # bf16 x bf16 -> f32 accumulation on the MXU.
    logits = jnp.dot(x_ref[...], w_ref[...], preferred_element_type=jnp.float32)
    logits = logits + b_ref[...]          # (1, Vp) f32 bias; padded lanes = -1e30
    logits_ref[...] = logits

    # cross-entropy (f32 softmax math; padded lanes vanish via the -1e30 bias)
    m = jnp.max(logits, axis=-1, keepdims=True)                              # (tn,1)
    lse = m + jnp.log(jnp.sum(jnp.exp(logits - m), axis=-1, keepdims=True))  # (tn,1)
    col = jax.lax.broadcasted_iota(jnp.int32, logits.shape, 1)               # (tn,Vp)
    sel = (col == tgt_ref[...]).astype(jnp.float32)                          # (tn,Vp)
    tgt_logit = jnp.sum(logits * sel, axis=-1, keepdims=True)                # (tn,1)
    acc_ref[0] += jnp.sum(lse - tgt_logit)

    @pl.when(i == pl.num_programs(0) - 1)
    def _finalize():
        loss_ref[0, 0] = acc_ref[0] / jnp.float32(n_rows)


def _logits_kernel(x_ref, w_ref, b_ref, logits_ref):
    """Inference-only path: no targets, no loss."""
    logits = jnp.dot(x_ref[...], w_ref[...], preferred_element_type=jnp.float32)
    logits_ref[...] = logits + b_ref[...]


# ---- wrapper -----------------------------------------------------------------
def prepare_params(params):
    """One-time weight prep: pad vocab to 128 lanes, pre-transpose, bf16-cast."""
    tok_table, pos_table, w, b = params
    V, E = w.shape
    Vp = _round_up(V, LANE)
    w_t = jnp.zeros((E, Vp), jnp.bfloat16).at[:, :V].set(w.T.astype(jnp.bfloat16))
    b_pad = jnp.full((1, Vp), NEG_INF_BIAS, jnp.float32).at[0, :V].set(b)
    return tok_table, pos_table, w_t, b_pad


def bigram_forward(idx, prepared, targets=None):
    tok_table, pos_table, w_t, b_pad = prepared
    B, T = idx.shape
    N = B * T
    E = tok_table.shape[1]
    Vp = w_t.shape[1]
    V = vocab_size

    # glue: embedding gathers + positional add (XLA fuses), cast to bf16 once.
    x = tok_table[idx] + pos_table[jnp.arange(T)]          # (B, T, E) f32
    x = x.reshape(N, E).astype(jnp.bfloat16)               # (N, E) bf16

    tile_n = _pick_tile_n(N)
    nt = N // tile_n

    x_spec = pl.BlockSpec((tile_n, E), lambda i: (i, 0))
    w_spec = pl.BlockSpec((E, Vp), lambda i: (0, 0))
    b_spec = pl.BlockSpec((1, Vp), lambda i: (0, 0))
    logits_spec = pl.BlockSpec((tile_n, Vp), lambda i: (i, 0))

    if targets is None:
        logits_p = pl.pallas_call(
            _logits_kernel,
            out_shape=jax.ShapeDtypeStruct((N, Vp), jnp.float32),
            grid=(nt,),
            in_specs=[x_spec, w_spec, b_spec],
            out_specs=logits_spec,
            compiler_params=pltpu.CompilerParams(
                dimension_semantics=("parallel",)),
        )(x, w_t, b_pad)
        return logits_p[:, :V].reshape(B, T, V), None

    tgt = targets.reshape(N, 1).astype(jnp.int32)           # (N, 1) int32

    logits_p, loss_out = pl.pallas_call(
        functools.partial(_loss_kernel, N),
        out_shape=(
            jax.ShapeDtypeStruct((N, Vp), jnp.float32),
            jax.ShapeDtypeStruct((1, 1), jnp.float32),
        ),
        grid=(nt,),
        in_specs=[
            x_spec,                                          # (tile_n, E) bf16
            w_spec,                                          # (E, Vp)   bf16
            b_spec,                                          # (1, Vp)   f32
            pl.BlockSpec((tile_n, 1), lambda i: (i, 0)),     # targets int32
        ],
        out_specs=(
            logits_spec,                                     # (tile_n, Vp) f32
            pl.BlockSpec(memory_space=pltpu.SMEM),           # scalar loss
        ),
        scratch_shapes=[pltpu.SMEM((1,), jnp.float32)],      # running loss sum
        compiler_params=pltpu.CompilerParams(
            dimension_semantics=("arbitrary",)),             # sequential loss accum
    )(x, w_t, b_pad, tgt)

    # PyTorch returns the (B*T, C)-viewed logits when targets are provided.
    return logits_p[:, :V], loss_out[0, 0]


# ---- deterministic parameter init (synthetic, no checkpoint) -----------------
def init_params(key):
    k1, k2, k3, k4 = jax.random.split(key, 4)
    tok_table = jax.random.normal(k1, (vocab_size, n_embed), jnp.float32)
    pos_table = jax.random.normal(k2, (block_size, n_embed), jnp.float32)
    bound = 1.0 / jnp.sqrt(n_embed)
    w = jax.random.uniform(k3, (vocab_size, n_embed), jnp.float32, -bound, bound)
    b = jax.random.uniform(k4, (vocab_size,), jnp.float32, -bound, bound)
    return tok_table, pos_table, w, b


# ---- pure-JAX reference (same bf16 matmul precision as the kernel) -----------
def reference_forward(idx, params, targets):
    tok_table, pos_table, w, b = params
    B, T = idx.shape
    N = B * T
    x = tok_table[idx] + pos_table[jnp.arange(T)]            # (B, T, E)
    x = x.reshape(N, n_embed).astype(jnp.bfloat16)
    logits = jnp.dot(x, w.T.astype(jnp.bfloat16),
                     preferred_element_type=jnp.float32) + b  # (N, V)
    t = targets.reshape(N)
    m = jnp.max(logits, axis=-1, keepdims=True)
    lse = m + jnp.log(jnp.sum(jnp.exp(logits - m), axis=-1, keepdims=True))
    loss = jnp.mean(lse[:, 0] - logits[jnp.arange(N), t])
    return logits, loss


if __name__ == "__main__":
    key = jax.random.PRNGKey(0)
    kp, ki, kt = jax.random.split(key, 3)

    params = init_params(kp)
    prepared = prepare_params(params)

    B, T = 2, block_size
    idx = jax.random.randint(ki, (B, T), 0, vocab_size, dtype=jnp.int32)
    targets = jax.random.randint(kt, (B, T), 0, vocab_size, dtype=jnp.int32)

    # training path (logits + loss)
    logits, loss = bigram_forward(idx, prepared, targets)
    logits = jax.block_until_ready(logits)
    loss = jax.block_until_ready(loss)

    # inference path (targets=None)
    logits_inf, loss_none = bigram_forward(idx, prepared, None)
    logits_inf = jax.block_until_ready(logits_inf)
    assert loss_none is None
    assert logits_inf.shape == (B, T, vocab_size)

    ref_logits, ref_loss = reference_forward(idx, params, targets)
    assert logits.shape == (B * T, vocab_size)
    assert jnp.allclose(logits, ref_logits, atol=2e-3, rtol=2e-3)
    assert jnp.allclose(loss, ref_loss, atol=2e-3, rtol=2e-3)
    assert jnp.allclose(logits_inf.reshape(B * T, vocab_size), ref_logits,
                        atol=2e-3, rtol=2e-3)

    print("KERNEL_OK")
</pallas_src>

<mosaic_0001>
module attributes {stable_mosaic.version = 11 : i64} {
  func.func @_loss_kernel(%arg0: i32, %arg1: memref<16x32xbf16, #tpu.memory_space<vmem>>, %arg2: memref<32x128xbf16, #tpu.memory_space<vmem>>, %arg3: memref<1x128xf32, #tpu.memory_space<vmem>>, %arg4: memref<16x1xi32, #tpu.memory_space<vmem>>, %arg5: memref<16x128xf32, #tpu.memory_space<vmem>>, %arg6: memref<1x1xf32, #tpu.memory_space<smem>>, %arg7: memref<1xf32, #tpu.memory_space<smem>>) attributes {dimension_semantics = [#tpu.dimension_semantics<arbitrary>], iteration_bounds = array<i64: 1>, scalar_prefetch = 0 : i64, scratch_operands = 1 : i64, tpu.core_type = #tpu.core_type<tc>, window_params = [{transform_indices = @transform_0, window_bounds = array<i64: 16, 32>}, {pipeline_mode = #tpu.pipeline_mode<synchronous>, transform_indices = @transform_1, window_bounds = array<i64: 32, 128>}, {pipeline_mode = #tpu.pipeline_mode<synchronous>, transform_indices = @transform_2, window_bounds = array<i64: 1, 128>}, {transform_indices = @transform_3, window_bounds = array<i64: 16, 1>}, {transform_indices = @transform_4, window_bounds = array<i64: 16, 128>}, {transform_indices = @transform_5, window_bounds = array<i64: 1, 1>}]} {
    %c0_i32 = arith.constant 0 : i32
    %0 = arith.cmpi eq, %arg0, %c0_i32 : i32
    %1 = arith.extui %0 : i1 to i32
    %c0_i32_0 = arith.constant 0 : i32
    %2 = arith.cmpi ne, %1, %c0_i32_0 : i32
    scf.if %2 {
      %cst_18 = arith.constant 0.000000e+00 : f32
      %c0_19 = arith.constant 0 : index
      %39 = memref.load %arg7[%c0_19] : memref<1xf32, #tpu.memory_space<smem>>
      memref.store %cst_18, %arg7[%c0_19] : memref<1xf32, #tpu.memory_space<smem>>
    } else {
    }
    %c0 = arith.constant 0 : index
    %c0_1 = arith.constant 0 : index
    %3 = vector.load %arg1[%c0, %c0_1] : memref<16x32xbf16, #tpu.memory_space<vmem>>, vector<16x32xbf16>
    %c0_2 = arith.constant 0 : index
    %c0_3 = arith.constant 0 : index
    %4 = vector.load %arg2[%c0_2, %c0_3] : memref<32x128xbf16, #tpu.memory_space<vmem>>, vector<32x128xbf16>
    %cst = arith.constant dense<0.000000e+00> : vector<16x128xf32>
    %5 = tpu.matmul %3, %4, %cst {dimension_numbers = #tpu.dot_dimension_numbers<[1], [0], [0], [1], [0, 0, 1, 1], [], []>} : vector<16x32xbf16>, vector<32x128xbf16>, vector<16x128xf32> -> vector<16x128xf32>
    %c0_4 = arith.constant 0 : index
    %c0_5 = arith.constant 0 : index
    %6 = vector.load %arg3[%c0_4, %c0_5] : memref<1x128xf32, #tpu.memory_space<vmem>>, vector<1x128xf32>
    %7 = vector.broadcast %6 : vector<1x128xf32> to vector<16x128xf32>
    %8 = arith.addf %5, %7 : vector<16x128xf32>
    %c0_6 = arith.constant 0 : index
    %c0_7 = arith.constant 0 : index
    %9 = vector.load %arg5[%c0_6, %c0_7] : memref<16x128xf32, #tpu.memory_space<vmem>>, vector<16x128xf32>
    tpu.vector_store %arg5[%c0_6, %c0_7], %8 {strides = array<i32>} : memref<16x128xf32, #tpu.memory_space<vmem>>, vector<16x128xf32>,
    %cst_8 = arith.constant dense<0xFF800000> : vector<16xf32>
    %10 = vector.multi_reduction <maximumf>, %8, %cst_8 [1] : vector<16x128xf32> to vector<16xf32>
    %11 = vector.shape_cast %10 : vector<16xf32> to vector<16x1xf32>
    %12 = vector.broadcast %11 : vector<16x1xf32> to vector<16x128xf32>
    %13 = arith.subf %8, %12 : vector<16x128xf32>
    %14 = math.exp %13 : vector<16x128xf32>
    %cst_9 = arith.constant dense<0.000000e+00> : vector<16xf32>
    %15 = vector.multi_reduction <add>, %14, %cst_9 [1] : vector<16x128xf32> to vector<16xf32>
    %16 = vector.shape_cast %15 : vector<16xf32> to vector<16x1xf32>
    %17 = math.log %16 : vector<16x1xf32>
    %18 = arith.addf %11, %17 : vector<16x1xf32>
    %19 = tpu.iota {dimensions = array<i32: 1>} : vector<16x128xi32>
    %c0_10 = arith.constant 0 : index
    %c0_11 = arith.constant 0 : index
    %20 = vector.load %arg4[%c0_10, %c0_11] : memref<16x1xi32, #tpu.memory_space<vmem>>, vector<16x1xi32>
    %21 = vector.broadcast %20 : vector<16x1xi32> to vector<16x128xi32>
    %22 = arith.cmpi eq, %19, %21 : vector<16x128xi32>
    %23 = arith.extui %22 : vector<16x128xi1> to vector<16x128xi32>
    %24 = arith.sitofp %23 : vector<16x128xi32> to vector<16x128xf32>
    %25 = arith.mulf %8, %24 : vector<16x128xf32>
    %cst_12 = arith.constant dense<0.000000e+00> : vector<16xf32>
    %26 = vector.multi_reduction <add>, %25, %cst_12 [1] : vector<16x128xf32> to vector<16xf32>
    %27 = vector.shape_cast %26 : vector<16xf32> to vector<16x1xf32>
    %c0_13 = arith.constant 0 : index
    %28 = memref.load %arg7[%c0_13] : memref<1xf32, #tpu.memory_space<smem>>
    %29 = arith.subf %18, %27 : vector<16x1xf32>
    %30 = vector.shape_cast %29 : vector<16x1xf32> to vector<1x16x1xf32>
    %cst_14 = arith.constant dense<0.000000e+00> : vector<1xf32>
    %31 = vector.multi_reduction <add>, %30, %cst_14 [1, 2] : vector<1x16x1xf32> to vector<1xf32>
    %32 = vector.shape_cast %31 : vector<1xf32> to vector<1x1x1xf32>
    %33 = vector.extract %32[0, 0, 0] : f32 from vector<1x1x1xf32>
    %34 = arith.addf %28, %33 : f32
    %c0_15 = arith.constant 0 : index
    %35 = memref.load %arg7[%c0_15] : memref<1xf32, #tpu.memory_space<smem>>
    memref.store %34, %arg7[%c0_15] : memref<1xf32, #tpu.memory_space<smem>>
    %c0_i32_16 = arith.constant 0 : i32
    %36 = arith.cmpi eq, %arg0, %c0_i32_16 : i32
    %37 = arith.extui %36 : i1 to i32
    %c0_i32_17 = arith.constant 0 : i32
    %38 = arith.cmpi ne, %37, %c0_i32_17 : i32
    scf.if %38 {
      %c0_18 = arith.constant 0 : index
      %39 = memref.load %arg7[%c0_18] : memref<1xf32, #tpu.memory_space<smem>>
      %cst_19 = arith.constant 1.600000e+01 : f32
      %40 = arith.divf %39, %cst_19 : f32
      %c0_20 = arith.constant 0 : index
      %c0_21 = arith.constant 0 : index
      %41 = memref.load %arg6[%c0_20, %c0_21] : memref<1x1xf32, #tpu.memory_space<smem>>
      memref.store %40, %arg6[%c0_20, %c0_21] : memref<1x1xf32, #tpu.memory_space<smem>>
    } else {
    }
    return
  }
  func.func @transform_0(%arg0: i32) -> (i32, i32) {
    %c0_i32 = arith.constant 0 : i32
    %c0_i32_0 = arith.constant 0 : i32
    return %arg0, %c0_i32 : i32, i32
  }
  func.func @transform_1(%arg0: i32) -> (i32, i32) {
    %c0_i32 = arith.constant 0 : i32
    %c0_i32_0 = arith.constant 0 : i32
    %c0_i32_1 = arith.constant 0 : i32
    return %c0_i32, %c0_i32_0 : i32, i32
  }
  func.func @transform_2(%arg0: i32) -> (i32, i32) {
    %c0_i32 = arith.constant 0 : i32
    %c0_i32_0 = arith.constant 0 : i32
    %c0_i32_1 = arith.constant 0 : i32
    return %c0_i32, %c0_i32_0 : i32, i32
  }
  func.func @transform_3(%arg0: i32) -> (i32, i32) {
    %c0_i32 = arith.constant 0 : i32
    %c0_i32_0 = arith.constant 0 : i32
    return %arg0, %c0_i32 : i32, i32
  }
  func.func @transform_4(%arg0: i32) -> (i32, i32) {
    %c0_i32 = arith.constant 0 : i32
    %c0_i32_0 = arith.constant 0 : i32
    return %arg0, %c0_i32 : i32, i32
  }
  func.func @transform_5(%arg0: i32) -> (i32, i32) {
    %c0_i32 = arith.constant 0 : i32
    %c0_i32_0 = arith.constant 0 : i32
    %c0_i32_1 = arith.constant 0 : i32
    return %c0_i32, %c0_i32_0 : i32, i32
  }
}

</mosaic_0001>

<llo_original>
// kernel: tpu_custom_call.1
$region0: #{tpu_custom_call.1}
  #allocation0 [shape = 'u32[]', space=smem, size = 0x4, offset = 0x4, fixed_abs, tag = 'smem constant byte address 0x4 - core index']
  #allocation1 [shape = 'u32[72,128]{1,0:T(1,128)}', space=vmem, size = 0x9000, scoped, tag = 'internal scratch']
  #allocation2 [shape = 'f32[1]{0:T(128)}', space=smem, size = 0x200, scoped, tag = 'scratch operand']
  %s0 = inlined_call_operand.hbm [shape: bf16[16,32], index: 0, kind: input, shape index: {}]
  %s1 = inlined_call_operand.vmem [shape: bf16[32,128], index: 1, kind: input, shape index: {}]
  %s2 = inlined_call_operand.vmem [shape: f32[1,128], index: 2, kind: input, shape index: {}]
  %s3 = inlined_call_operand.vmem [shape: s32[16,1], index: 3, kind: input, shape index: {}]
  %s4 = inlined_call_operand.hbm [shape: f32[16,128], index: 4, kind: output, shape index: {0}]
  %s5 = inlined_call_operand.hbm [shape: f32[1,1], index: 5, kind: output, shape index: {1}]
  %6 = xla_tuple %s4, %s5
  %s7 = sld [smem:[#allocation0]]
  $region46: #{tpu_custom_call.1} parent=0
    _
  %s9 = ssub.s32 1, %s7
  %s10 = scalar_select 0, %s9, %s7
  $region1: #{tpu_custom_call.1} parent=0
    #allocation3 [shape = 'u8[4096]{0}', space=vmem, size = 0x1000, scoped, tag = 'input window, operand 0, single buffered']
    #allocation4 [shape = 's32[1]{0}', space=sflag, size = 0x4, scoped, tag = 'scoped memory for tpu_custom_call.1']
    #allocation5 [shape = 's32[1]{0}', space=sflag, size = 0x4, scoped, tag = 'scoped memory for tpu_custom_call.1']
    #allocation6 [shape = 's32[1]{0}', space=sflag, size = 0x4, scoped, tag = 'scoped memory for tpu_custom_call.1']
    #allocation7 [shape = 'u8[8192]{0}', space=vmem, size = 0x2000, scoped, tag = 'output window, operand 0, single buffered']
    #allocation8 [shape = 'u8[512]{0}', space=smem, size = 0x200, scoped, tag = 'output window, operand 1, single buffered']
    %11 = vsyncpa [#allocation4], 0
    %12 = vsyncpa [#allocation5], 0
    %13 = vsyncpa [#allocation6], 0
    // Predicated region
    $region2: #{tpu_custom_call.1} parent=1 // pred_check
      _
    $region3: #{tpu_custom_call.1} parent=1 // pred_check_branch
      %15 = sbr.rel (0) target = $region5
    $region4: #{tpu_custom_call.1} parent=1 // pred_region
      %17 = vsyncadd [#allocation4], 0
      %s18 = sshll.u32 %s0, 4
      %s19 = int_to_ptr.hbm [resolvable:$true] %s18
      %s20 = sshll.u32 [#allocation3], 4
      %s21 = int_to_ptr.vmem [resolvable:$true] %s20
      %26 = dma.hbm_to_vmem [thread:$0]  %s19, 128, %s21, [#allocation4], 64, 64, 4
    $region5: #{tpu_custom_call.1} parent=1 // pred_fallthru
      _
    // Predicated region
    $region6: #{tpu_custom_call.1} parent=1 // pred_check
      _
    $region7: #{tpu_custom_call.1} parent=1 // pred_check_branch
      %28 = sbr.rel (0) target = $region9
    $region8: #{tpu_custom_call.1} parent=1 // pred_region
      _
    $region9: #{tpu_custom_call.1} parent=1 // pred_fallthru
      _
    // Predicated region
    $region10: #{tpu_custom_call.1} parent=1 // pred_check
      _
    $region11: #{tpu_custom_call.1} parent=1 // pred_check_branch
      %30 = sbr.rel (0) target = $region13
    $region12: #{tpu_custom_call.1} parent=1 // pred_region
      _
    $region13: #{tpu_custom_call.1} parent=1 // pred_fallthru
      _
    // Predicated region
    $region14: #{tpu_custom_call.1} parent=1 // pred_check
      _
    $region15: #{tpu_custom_call.1} parent=1 // pred_check_branch
      %32 = sbr.rel (0) target = $region17
    $region16: #{tpu_custom_call.1} parent=1 // pred_region
      _
    $region17: #{tpu_custom_call.1} parent=1 // pred_fallthru
      _
    // Predicated region
    $region18: #{tpu_custom_call.1} parent=1 // pred_check
      _
    $region19: #{tpu_custom_call.1} parent=1 // pred_check_branch
      %34 = sbr.rel (0) target = $region21
    $region20: #{tpu_custom_call.1} parent=1 // pred_region
      %36 = dma.done [#allocation4], 128
    $region21: #{tpu_custom_call.1} parent=1 // pred_fallthru
      _
    %p38 = scmp.eq.s32.totalorder 0, 0
    // Predicated region
    $region22: #{tpu_custom_call.1} parent=1 // pred_check
      %p39 = pneg %p38
    $region23: #{tpu_custom_call.1} parent=1 // pred_check_branch
      %41 = sbr.rel (%p39) target = $region25
    $region24: #{tpu_custom_call.1} parent=1 // pred_region
      %s42 = scalar_lea.smem [#allocation2], 0
      %43 = sst [smem:[%s42]] 0.0
    $region25: #{tpu_custom_call.1} parent=1 // pred_fallthru
      _
    %v44 = vld [vmem:[#allocation3] sm:$0xf]
    %v45 = vld [vmem:[#allocation3 + $0x4] sm:$0xf]
    %v46 = vld [vmem:[%s1] sm:$0xf]
    %v47 = vld [vmem:[%s1 + $0x4] sm:$0xf]
    %v48 = vld [vmem:[%s1 + $0x8] sm:$0xf]
    %v49 = vld [vmem:[%s1 + $0xc] sm:$0xf]
    %v50 = vld [vmem:[%s2] sm:$0x1]
    %v52 = vperm.slane %v50, 0
    %v56 = vunpack.c.l.b16 %v44
    %v57 = vunpack.c.l.b16 %v45
    %v58 = vpack.c.b16 %v57, %v56
    %v63 = vunpack.c.l.b16 %v46
    %v64 = vunpack.c.l.b16 %v47
    %v65 = vunpack.c.l.b16 %v48
    %v66 = vunpack.c.l.b16 %v49
    %v67 = vpack.c.b16 %v64, %v63
    %v68 = vpack.c.b16 %v66, %v65
    %vm71 = vcmask 261120
    %v73 = vsel %vm71, %v58, 0
    %75 = vmatpush.bf16.msra.mxu0 0
    %76 = vmatpush.bf16.msra.mxu0 0
    %77 = vmatpush.bf16.msra.mxu0 0
    %78 = vmatpush.bf16.msra.mxu0 0
    %79 = vmatpush.bf16.msra.mxu0 0
    %80 = vmatpush.bf16.msra.mxu0 0
    %81 = vmatpush.bf16.msra.mxu0 %v68
    %82 = vmatpush.bf16.msra.mxu0 %v67
    %83 = vmatmul.bf16.gmra.mxu0 %v73
    %v84 = vpop.f32.mrf.mxu0
    %v85 = vadd.f32 %v52, %v84
    %v86 = vpop.f32.mrf.mxu0
    %v87 = vadd.f32 %v52, %v86
    %88 = vdwg.mxu0
    %89 = vst [vmem:[#allocation7] sm:$0xff] %v85
    %90 = vst [vmem:[#allocation7 + $0x8] sm:$0xff] %v87
    %91 = vmax.xlane.f32.xlu0 %v85
    %v92 = vpop.xlane.xlu0 %91
    %93 = vmax.xlane.f32.xlu0 %v87
    %v94 = vpop.xlane.xlu0 %93
    %v95 = vsub.f32 %v85, %v92
    %v96 = vsub.f32 %v87, %v94
    %v97 = vmul.f32 %v95, 1.442695
    %v98 = vpow.pop %v97
    %v99 = vmul.f32 %v96, 1.442695
    %v100 = vpow.pop %v99
    %101 = vadd.xlane.f32.xlu0 %v98
    %v102 = vpop.xlane.xlu0 %101
    %103 = vadd.xlane.f32.xlu0 %v100
    %v104 = vpop.xlane.xlu0 %103
    %v105 = vlog2.pop %v102
    %v106 = vmul.f32 %v105, 0.6931472
    %v107 = vlog2.pop %v104
    %v108 = vmul.f32 %v107, 0.6931472
    %v109 = vadd.f32 %v92, %v106
    %v110 = vadd.f32 %v94, %v108
    %v111 = vlaneseq
    %v112 = vand.u32 %v111, 127
    %v113 = vld [vmem:[%s3] sm:$0xff]
    %v114 = vld [vmem:[%s3 + $0x8] sm:$0xff]
    %115 = vset.pattern.permute.xlu0 0
    %116 = vperm.xlu0 %115, %v113
    %v117 = vpop.permute.xlu0 %116
    %118 = vset.pattern.permute.xlu0 0
    %119 = vperm.xlu0 %118, %v114
    %v120 = vpop.permute.xlu0 %119
    %vm121 = vcmp.eq.s32.totalorder %v112, %v117
    %vm122 = vcmp.eq.s32.totalorder %v112, %v120
    %v123 = vsel %vm121, 1, 0
    %v124 = vsel %vm122, 1, 0
    %v125 = vcvt.s32.f32 %v123
    %v126 = vcvt.s32.f32 %v124
    %v127 = vmul.f32 %v85, %v125
    %v128 = vmul.f32 %v87, %v126
    %129 = vadd.xlane.f32.xlu0 %v127
    %v130 = vpop.xlane.xlu0 %129
    %131 = vadd.xlane.f32.xlu0 %v128
    %v132 = vpop.xlane.xlu0 %131
    %s133 = sld [smem:[#allocation2]]
    %v134 = vsub.f32 %v109, %v130
    %v135 = vsub.f32 %v110, %v132
    %vm136 = vcmask 7168
    %v137 = vsel %vm136, %v134, 0.0
    %v138 = vsel %vm136, %v135, 0.0
    %v139 = vadd.f32 %v137, %v138
    %140 = vadd.xlane.f32.xlu0 %v139
    %v141 = vpop.xlane.xlu0 %140
    %v142 = vrot.slane %v141, 4
    %v143 = vadd.f32 %v141, %v142
    %v144 = vrot.slane %v143, 2
    %v145 = vadd.f32 %v143, %v144
    %v146 = vrot.slane %v145, 1
    %v147 = vadd.f32 %v145, %v146
    %s148 = vtos %v147
    %s149 = sadd.f32 %s133, %s148
    %s150 = scalar_lea.smem [#allocation2], 0
    %151 = sst [smem:[%s150]] %s149
    // Predicated region
    $region26: #{tpu_custom_call.1} parent=1 // pred_check
      %p152 = pneg %p38
    $region27: #{tpu_custom_call.1} parent=1 // pred_check_branch
      %154 = sbr.rel (%p152) target = $region29
    $region28: #{tpu_custom_call.1} parent=1 // pred_region
      %s155 = sld [smem:[#allocation2]]
      %v156 = vrcp.pop 16.0
      %v157 = vmul.f32 16.0, %v156
      %v158 = vsub.f32 1.0, %v157
      %v159 = vmul.f32 %v156, %v158
      %v160 = vadd.f32 %v156, %v159
      %vm161 = vweird.f32 %v156
      %v162 = vsel %vm161, %v156, %v160
      %s163 = vtos %v162
      %s164 = smul.f32 %s155, %s163
      %s165 = scalar_lea.smem [#allocation8], 0
      %166 = sst [smem:[%s165]] %s164
    $region29: #{tpu_custom_call.1} parent=1 // pred_fallthru
      _
    // Predicated region
    $region30: #{tpu_custom_call.1} parent=1 // pred_check
      _
    $region31: #{tpu_custom_call.1} parent=1 // pred_check_branch
      %168 = sbr.rel (0) target = $region33
    $region32: #{tpu_custom_call.1} parent=1 // pred_region
      %170 = vsyncadd [#allocation5], 0
      %s171 = sshll.u32 [#allocation7], 4
      %s172 = int_to_ptr.vmem [resolvable:$true] %s171
      %s173 = sshll.u32 %s4, 4
      %s174 = int_to_ptr.hbm [resolvable:$true] %s173
      %179 = dma.vmem_to_hbm [thread:$0]  %s172, 256, %s174, [#allocation5], 128, 128, 8
    $region33: #{tpu_custom_call.1} parent=1 // pred_fallthru
      _
    // Predicated region
    $region34: #{tpu_custom_call.1} parent=1 // pred_check
      _
    $region35: #{tpu_custom_call.1} parent=1 // pred_check_branch
      %181 = sbr.rel (0) target = $region37
    $region36: #{tpu_custom_call.1} parent=1 // pred_region
      %183 = vsyncadd [#allocation6], 0
      %s185 = sshll.u32 %s5, 4
      %s186 = int_to_ptr.hbm [resolvable:$true] %s185
      %188 = dma.smem_to_hbm [#allocation8], 16, %s186, [#allocation6]
    $region37: #{tpu_custom_call.1} parent=1 // pred_fallthru
      _
    // Predicated region
    $region38: #{tpu_custom_call.1} parent=1 // pred_check
      _
    $region39: #{tpu_custom_call.1} parent=1 // pred_check_branch
      %190 = sbr.rel (0) target = $region41
    $region40: #{tpu_custom_call.1} parent=1 // pred_region
      %192 = dma.done [#allocation5], 256
    $region41: #{tpu_custom_call.1} parent=1 // pred_fallthru
      _
    // Predicated region
    $region42: #{tpu_custom_call.1} parent=1 // pred_check
      _
    $region43: #{tpu_custom_call.1} parent=1 // pred_check_branch
      %194 = sbr.rel (0) target = $region45
    $region44: #{tpu_custom_call.1} parent=1 // pred_region
      %196 = dma.done [#allocation6], 16
    $region45: #{tpu_custom_call.1} parent=1 // pred_fallthru
      _
    %197 = sfence
    %198 = vsyncpa [#allocation4], 1
    %199 = vsyncpa [#allocation5], 1
    %200 = vsyncpa [#allocation6], 1

</llo_original>
